<compile_context>
chip_gen: v5e
topology: v5e:2x2
jax: 0.10.0
libtpu: 0.0.40
codegen_flags: <defaults>
</compile_context>

<pallas_src>
import functools

import jax
import jax.numpy as jnp
import numpy as np
from jax import lax
from jax.experimental import pallas as pl
from jax.experimental.pallas import tpu as pltpu


def _stma_kernel(xin_ref, w_ref, scale_ref, add_ref, attn_ref, v_ref, *, c, nb):
    # xin_ref   : (nb, 2C+1, HW)  per-batch stacked [x2 ; x1 ; ones]
    # w_ref     : (3C, 2C+1)      block-diag [wq|0|bq ; 0|wk|bk ; 0|wv|bv]
    # scale_ref : (C, C)          per-head temperature in-block, 0 off-block
    # add_ref   : (C, C)          0 in-block, -1e30 off-block
    # attn_ref  : (nb, C, C)      block-diagonal softmax scores
    # v_ref     : (nb, C, HW)     value projection
    w = w_ref[...]
    scale = scale_ref[...]
    add = add_ref[...]
    eps2 = jnp.float32(1e-24)  # F.normalize eps = 1e-12, clamp on squared norm

    for i in range(nb):  # nb is a small static constant (1 or b)
        xi = xin_ref[i]                                              # (2C+1, HW)

        # Fused q/k/v 1x1-conv projection (+bias) in one MXU sequence.
        proj = jnp.dot(w, xi, preferred_element_type=jnp.float32)    # (3C, HW)
        q = proj[:c, :]
        k = proj[c:2 * c, :]

        # Early v store: frees its vregs before normalize/softmax.
        v_ref[i] = proj[2 * c:, :].astype(v_ref.dtype)

        # F.normalize(x, dim=-1) == x * rsqrt(max(sum(x^2), eps^2))  (EUP rsqrt)
        qn = q * lax.rsqrt(jnp.maximum(jnp.sum(q * q, axis=-1, keepdims=True), eps2))
        kn = k * lax.rsqrt(jnp.maximum(jnp.sum(k * k, axis=-1, keepdims=True), eps2))

        # All-head scores in one MXU push, contracting last dims (no transpose).
        s = lax.dot_general(qn, kn, dimension_numbers=(((1,), (1,)), ((), ())),
                            preferred_element_type=jnp.float32)      # (C, C)

        # Per-head temperature + block-diagonal mask, precomputed in the wrapper.
        s = s * scale + add

        # Row softmax; off-block entries underflow to exactly 0, so the diagonal
        # blocks equal the per-head softmax of the reference module.
        m = jnp.max(s, axis=-1, keepdims=True)
        e = jnp.exp(s - m)
        denom = jnp.sum(e, axis=-1, keepdims=True)
        attn_ref[i] = (e * pl.reciprocal(denom, approx=False)).astype(attn_ref.dtype)


def spatio_temporal_mutual_attention(inp1, inp2, params, num_heads, batch_block=None):
    """Forward pass. inp1/inp2: (b, c, h, w) NCHW, matching the PyTorch module.

    Returns (attn, v):
      attn: (b, num_heads, c//num_heads, c//num_heads)
      v   : (b, num_heads, c//num_heads, h*w)
    """
    assert inp1.shape == inp2.shape
    b, c, h, w = inp1.shape
    hw = h * w
    ch = c // num_heads
    assert ch * num_heads == c

    x1 = inp1.reshape(b, c, hw).astype(jnp.float32)   # image branch (k, v)
    x2 = inp2.reshape(b, c, hw).astype(jnp.float32)   # event branch (q)

    # Stacked per-batch input [x2 ; x1 ; ones] so one matmul yields q, k, v
    # (the ones row carries the folded biases).
    xin = jnp.concatenate([x2, x1, jnp.ones((b, 1, hw), jnp.float32)], axis=1)

    # Fused block-diagonal weight with bias column:
    #   rows [0,  C): q = wq @ x2 + bq
    #   rows [C, 2C): k = wk @ x1 + bk
    #   rows [2C,3C): v = wv @ x1 + bv
    wq = params["wq"].reshape(c, c).astype(jnp.float32)
    wk = params["wk"].reshape(c, c).astype(jnp.float32)
    wv = params["wv"].reshape(c, c).astype(jnp.float32)
    bq = params["bq"].reshape(c, 1).astype(jnp.float32)
    bk = params["bk"].reshape(c, 1).astype(jnp.float32)
    bv = params["bv"].reshape(c, 1).astype(jnp.float32)
    zc = jnp.zeros((c, c), jnp.float32)
    w_full = jnp.concatenate([
        jnp.concatenate([wq, zc, bq], axis=1),
        jnp.concatenate([zc, wk, bk], axis=1),
        jnp.concatenate([zc, wv, bv], axis=1),
    ], axis=0)                                                      # (3C, 2C+1)

    # Precomputed per-row temperature scale (in-block) and -1e30 additive mask
    # (off-block): in-kernel masking is a single `s*scale + add`.
    temp = params["temperature"].reshape(num_heads).astype(jnp.float32)
    row_head = jnp.arange(c)[:, None] // ch                         # (C, 1)
    col_head = jnp.arange(c)[None, :] // ch                         # (1, C)
    in_block = row_head == col_head                                 # (C, C)
    scale = jnp.where(in_block, temp[row_head], jnp.float32(0.0))
    add = jnp.where(in_block, jnp.float32(0.0), jnp.float32(-1e30))

    # Batch blocking: one batch per grid step on 2-TC chips (v7x) so both cores
    # are busy; collapse the whole batch into a single step on 1-TC chips
    # (v5e/v6e) to avoid per-step pipeline overhead dominating this tiny kernel.
    if batch_block is None:
        try:
            kind = jax.devices()[0].device_kind.lower()
        except Exception:
            kind = ""
        batch_block = 1 if ("v7" in kind and b > 1) else b
    nb = batch_block
    assert b % nb == 0
    grid = (pl.cdiv(b, nb),)

    kernel = functools.partial(_stma_kernel, c=c, nb=nb)

    attn_full, v_out = pl.pallas_call(
        kernel,
        out_shape=(
            jax.ShapeDtypeStruct((b, c, c), jnp.float32),
            jax.ShapeDtypeStruct((b, c, hw), jnp.float32),
        ),
        grid_spec=pltpu.PrefetchScalarGridSpec(
            num_scalar_prefetch=0,
            grid=grid,
            in_specs=[
                pl.BlockSpec((nb, 2 * c + 1, hw), lambda i: (i, 0, 0)),  # [x2;x1;1]
                pl.BlockSpec((3 * c, 2 * c + 1), lambda i: (0, 0)),      # fused W
                pl.BlockSpec((c, c), lambda i: (0, 0)),                  # temp scale
                pl.BlockSpec((c, c), lambda i: (0, 0)),                  # -1e30 mask
            ],
            out_specs=[
                pl.BlockSpec((nb, c, c), lambda i: (i, 0, 0)),
                pl.BlockSpec((nb, c, hw), lambda i: (i, 0, 0)),
            ],
        ),
        compiler_params=pltpu.CompilerParams(
            dimension_semantics=("parallel",)),
    )(xin, w_full, scale, add)

    # Per-head attention = diagonal (ch x ch) blocks of the full (c x c) matrix.
    blocks = [attn_full[:, hh * ch:(hh + 1) * ch, hh * ch:(hh + 1) * ch]
              for hh in range(num_heads)]
    attn = jnp.stack(blocks, axis=1)                    # (b, nh, ch, ch)
    v = v_out.reshape(b, num_heads, ch, hw)             # pure reshape, lane-dense store
    return attn, v


def _reference(inp1, inp2, params, num_heads):
    """Pure-JAX reference mirroring the PyTorch forward, for validation."""
    b, c, h, w = inp1.shape
    hw = h * w
    ch = c // num_heads
    x1 = inp1.reshape(b, c, hw)
    x2 = inp2.reshape(b, c, hw)
    wq, wk, wv = (params[k].reshape(c, c) for k in ("wq", "wk", "wv"))
    bq, bk, bv = (params[k].reshape(1, c, 1) for k in ("bq", "bk", "bv"))
    q = jnp.einsum("oc,bcs->bos", wq, x2) + bq
    k = jnp.einsum("oc,bcs->bos", wk, x1) + bk
    v = jnp.einsum("oc,bcs->bos", wv, x1) + bv
    q = q.reshape(b, num_heads, ch, hw)
    k = k.reshape(b, num_heads, ch, hw)
    v = v.reshape(b, num_heads, ch, hw)
    eps = 1e-12
    q = q / jnp.maximum(jnp.linalg.norm(q, axis=-1, keepdims=True), eps)
    k = k / jnp.maximum(jnp.linalg.norm(k, axis=-1, keepdims=True), eps)
    temp = params["temperature"].reshape(1, num_heads, 1, 1)
    attn = jnp.einsum("bhcs,bhds->bhcd", q, k) * temp
    attn = jax.nn.softmax(attn, axis=-1)
    return attn, v


if __name__ == "__main__":
    # Module config: dim=32, num_heads=4, bias=True; input (b, c, h, w) = (2, 32, 16, 16)
    dim, num_heads = 32, 4
    b, h, w = 2, 16, 16

    key = jax.random.PRNGKey(0)
    ks = jax.random.split(key, 10)
    params = {
        "wq": jax.random.normal(ks[0], (dim, dim), jnp.float32) * 0.1,
        "wk": jax.random.normal(ks[1], (dim, dim), jnp.float32) * 0.1,
        "wv": jax.random.normal(ks[2], (dim, dim), jnp.float32) * 0.1,
        "bq": jax.random.normal(ks[3], (dim,), jnp.float32) * 0.1,
        "bk": jax.random.normal(ks[4], (dim,), jnp.float32) * 0.1,
        "bv": jax.random.normal(ks[5], (dim,), jnp.float32) * 0.1,
        # nn.Parameter of shape (num_heads, 1, 1); random values exercise the
        # per-head temperature path (init in PyTorch is ones).
        "temperature": jax.random.uniform(ks[8], (num_heads, 1, 1), jnp.float32,
                                          minval=0.5, maxval=2.0),
    }

    inp1 = jax.random.normal(ks[6], (b, dim, h, w), jnp.float32)  # image-branch feature
    inp2 = jax.random.normal(ks[7], (b, dim, h, w), jnp.float32)  # event-branch feature

    fwd = jax.jit(functools.partial(spatio_temporal_mutual_attention,
                                    num_heads=num_heads))
    attn, v = fwd(inp1, inp2, params)
    jax.block_until_ready((attn, v))

    attn_ref, v_ref = _reference(inp1, inp2, params, num_heads)
    assert attn.shape == (b, num_heads, dim // num_heads, dim // num_heads)
    assert v.shape == (b, num_heads, dim // num_heads, h * w)
    assert np.allclose(np.asarray(attn), np.asarray(attn_ref), atol=1e-5, rtol=1e-5)
    assert np.allclose(np.asarray(v), np.asarray(v_ref), atol=1e-5, rtol=1e-5)

    print("KERNEL_OK")
</pallas_src>

<mosaic_0001>
module attributes {stable_mosaic.version = 11 : i64} {
  func.func @_stma_kernel(%arg0: i32, %arg1: memref<2x65x256xf32, #tpu.memory_space<vmem>>, %arg2: memref<96x65xf32, #tpu.memory_space<vmem>>, %arg3: memref<32x32xf32, #tpu.memory_space<vmem>>, %arg4: memref<32x32xf32, #tpu.memory_space<vmem>>, %arg5: memref<2x32x32xf32, #tpu.memory_space<vmem>>, %arg6: memref<2x32x256xf32, #tpu.memory_space<vmem>>) attributes {dimension_semantics = [#tpu.dimension_semantics<parallel>], iteration_bounds = array<i64: 1>, scalar_prefetch = 0 : i64, scratch_operands = 0 : i64, tpu.core_type = #tpu.core_type<tc>, window_params = [{transform_indices = @transform_0, window_bounds = array<i64: 2, 65, 256>}, {pipeline_mode = #tpu.pipeline_mode<synchronous>, transform_indices = @transform_1, window_bounds = array<i64: 96, 65>}, {pipeline_mode = #tpu.pipeline_mode<synchronous>, transform_indices = @transform_2, window_bounds = array<i64: 32, 32>}, {pipeline_mode = #tpu.pipeline_mode<synchronous>, transform_indices = @transform_3, window_bounds = array<i64: 32, 32>}, {transform_indices = @transform_4, window_bounds = array<i64: 2, 32, 32>}, {transform_indices = @transform_5, window_bounds = array<i64: 2, 32, 256>}]} {
    %c0 = arith.constant 0 : index
    %c0_0 = arith.constant 0 : index
    %0 = vector.load %arg2[%c0, %c0_0] : memref<96x65xf32, #tpu.memory_space<vmem>>, vector<96x65xf32>
    %c0_1 = arith.constant 0 : index
    %c0_2 = arith.constant 0 : index
    %1 = vector.load %arg3[%c0_1, %c0_2] : memref<32x32xf32, #tpu.memory_space<vmem>>, vector<32x32xf32>
    %c0_3 = arith.constant 0 : index
    %c0_4 = arith.constant 0 : index
    %2 = vector.load %arg4[%c0_3, %c0_4] : memref<32x32xf32, #tpu.memory_space<vmem>>, vector<32x32xf32>
    %c0_5 = arith.constant 0 : index
    %c0_6 = arith.constant 0 : index
    %c0_7 = arith.constant 0 : index
    %3 = vector.load %arg1[%c0_5, %c0_6, %c0_7] : memref<2x65x256xf32, #tpu.memory_space<vmem>>, vector<1x65x256xf32>
    %4 = vector.shape_cast %3 : vector<1x65x256xf32> to vector<65x256xf32>
    %cst = arith.constant dense<0.000000e+00> : vector<96x256xf32>
    %5 = tpu.matmul %0, %4, %cst {dimension_numbers = #tpu.dot_dimension_numbers<[1], [0], [0], [1], [0, 0, 1, 1], [], []>} : vector<96x65xf32>, vector<65x256xf32>, vector<96x256xf32> -> vector<96x256xf32>
    %6 = vector.extract_strided_slice %5 {offsets = [0, 0], sizes = [32, 256], strides = [1, 1]} : vector<96x256xf32> to vector<32x256xf32>
    %7 = vector.extract_strided_slice %5 {offsets = [32, 0], sizes = [32, 256], strides = [1, 1]} : vector<96x256xf32> to vector<32x256xf32>
    %8 = vector.extract_strided_slice %5 {offsets = [64, 0], sizes = [32, 256], strides = [1, 1]} : vector<96x256xf32> to vector<32x256xf32>
    %c0_8 = arith.constant 0 : index
    %c0_9 = arith.constant 0 : index
    %c0_10 = arith.constant 0 : index
    %9 = vector.load %arg6[%c0_8, %c0_9, %c0_10] : memref<2x32x256xf32, #tpu.memory_space<vmem>>, vector<1x32x256xf32>
    %10 = vector.shape_cast %9 : vector<1x32x256xf32> to vector<32x256xf32>
    %11 = vector.shape_cast %8 : vector<32x256xf32> to vector<1x32x256xf32>
    tpu.vector_store %arg6[%c0_8, %c0_9, %c0_10], %11 {strides = array<i32>} : memref<2x32x256xf32, #tpu.memory_space<vmem>>, vector<1x32x256xf32>,
    %12 = arith.mulf %6, %6 : vector<32x256xf32>
    %cst_11 = arith.constant dense<0.000000e+00> : vector<32xf32>
    %13 = vector.multi_reduction <add>, %12, %cst_11 [1] : vector<32x256xf32> to vector<32xf32>
    %14 = vector.shape_cast %13 : vector<32xf32> to vector<32x1xf32>
    %cst_12 = arith.constant 1.000000e-24 : f32
    %15 = vector.broadcast %cst_12 : f32 to vector<32x1xf32>
    %16 = arith.maximumf %14, %15 : vector<32x1xf32>
    %17 = math.rsqrt %16 : vector<32x1xf32>
    %18 = vector.broadcast %17 : vector<32x1xf32> to vector<32x256xf32>
    %19 = arith.mulf %6, %18 : vector<32x256xf32>
    %20 = arith.mulf %7, %7 : vector<32x256xf32>
    %cst_13 = arith.constant dense<0.000000e+00> : vector<32xf32>
    %21 = vector.multi_reduction <add>, %20, %cst_13 [1] : vector<32x256xf32> to vector<32xf32>
    %22 = vector.shape_cast %21 : vector<32xf32> to vector<32x1xf32>
    %cst_14 = arith.constant 1.000000e-24 : f32
    %23 = vector.broadcast %cst_14 : f32 to vector<32x1xf32>
    %24 = arith.maximumf %22, %23 : vector<32x1xf32>
    %25 = math.rsqrt %24 : vector<32x1xf32>
    %26 = vector.broadcast %25 : vector<32x1xf32> to vector<32x256xf32>
    %27 = arith.mulf %7, %26 : vector<32x256xf32>
    %cst_15 = arith.constant dense<0.000000e+00> : vector<32x32xf32>
    %28 = tpu.matmul %19, %27, %cst_15 {dimension_numbers = #tpu.dot_dimension_numbers<[1], [1], [0], [0], [0, 0, 1, 0], [], []>} : vector<32x256xf32>, vector<32x256xf32>, vector<32x32xf32> -> vector<32x32xf32>
    %29 = arith.mulf %28, %1 : vector<32x32xf32>
    %30 = arith.addf %29, %2 : vector<32x32xf32>
    %cst_16 = arith.constant dense<0xFF800000> : vector<32xf32>
    %31 = vector.multi_reduction <maximumf>, %30, %cst_16 [1] : vector<32x32xf32> to vector<32xf32>
    %32 = vector.shape_cast %31 : vector<32xf32> to vector<32x1xf32>
    %33 = vector.broadcast %32 : vector<32x1xf32> to vector<32x32xf32>
    %34 = arith.subf %30, %33 : vector<32x32xf32>
    %35 = math.exp %34 : vector<32x32xf32>
    %cst_17 = arith.constant dense<0.000000e+00> : vector<32xf32>
    %36 = vector.multi_reduction <add>, %35, %cst_17 [1] : vector<32x32xf32> to vector<32xf32>
    %37 = vector.shape_cast %36 : vector<32xf32> to vector<32x1xf32>
    %38 = tpu.reciprocal %37 : vector<32x1xf32> -> vector<32x1xf32>
    %39 = vector.broadcast %38 : vector<32x1xf32> to vector<32x32xf32>
    %40 = arith.mulf %35, %39 : vector<32x32xf32>
    %c0_18 = arith.constant 0 : index
    %c0_19 = arith.constant 0 : index
    %c0_20 = arith.constant 0 : index
    %41 = vector.load %arg5[%c0_18, %c0_19, %c0_20] : memref<2x32x32xf32, #tpu.memory_space<vmem>>, vector<1x32x32xf32>
    %42 = vector.shape_cast %41 : vector<1x32x32xf32> to vector<32x32xf32>
    %43 = vector.shape_cast %40 : vector<32x32xf32> to vector<1x32x32xf32>
    tpu.vector_store %arg5[%c0_18, %c0_19, %c0_20], %43 {strides = array<i32>} : memref<2x32x32xf32, #tpu.memory_space<vmem>>, vector<1x32x32xf32>,
    %c1 = arith.constant 1 : index
    %c0_21 = arith.constant 0 : index
    %c0_22 = arith.constant 0 : index
    %44 = vector.load %arg1[%c1, %c0_21, %c0_22] : memref<2x65x256xf32, #tpu.memory_space<vmem>>, vector<1x65x256xf32>
    %45 = vector.shape_cast %44 : vector<1x65x256xf32> to vector<65x256xf32>
    %cst_23 = arith.constant dense<0.000000e+00> : vector<96x256xf32>
    %46 = tpu.matmul %0, %45, %cst_23 {dimension_numbers = #tpu.dot_dimension_numbers<[1], [0], [0], [1], [0, 0, 1, 1], [], []>} : vector<96x65xf32>, vector<65x256xf32>, vector<96x256xf32> -> vector<96x256xf32>
    %47 = vector.extract_strided_slice %46 {offsets = [0, 0], sizes = [32, 256], strides = [1, 1]} : vector<96x256xf32> to vector<32x256xf32>
    %48 = vector.extract_strided_slice %46 {offsets = [32, 0], sizes = [32, 256], strides = [1, 1]} : vector<96x256xf32> to vector<32x256xf32>
    %49 = vector.extract_strided_slice %46 {offsets = [64, 0], sizes = [32, 256], strides = [1, 1]} : vector<96x256xf32> to vector<32x256xf32>
    %c1_24 = arith.constant 1 : index
    %c0_25 = arith.constant 0 : index
    %c0_26 = arith.constant 0 : index
    %50 = vector.load %arg6[%c1_24, %c0_25, %c0_26] : memref<2x32x256xf32, #tpu.memory_space<vmem>>, vector<1x32x256xf32>
    %51 = vector.shape_cast %50 : vector<1x32x256xf32> to vector<32x256xf32>
    %52 = vector.shape_cast %49 : vector<32x256xf32> to vector<1x32x256xf32>
    tpu.vector_store %arg6[%c1_24, %c0_25, %c0_26], %52 {strides = array<i32>} : memref<2x32x256xf32, #tpu.memory_space<vmem>>, vector<1x32x256xf32>,
    %53 = arith.mulf %47, %47 : vector<32x256xf32>
    %cst_27 = arith.constant dense<0.000000e+00> : vector<32xf32>
    %54 = vector.multi_reduction <add>, %53, %cst_27 [1] : vector<32x256xf32> to vector<32xf32>
    %55 = vector.shape_cast %54 : vector<32xf32> to vector<32x1xf32>
    %cst_28 = arith.constant 1.000000e-24 : f32
    %56 = vector.broadcast %cst_28 : f32 to vector<32x1xf32>
    %57 = arith.maximumf %55, %56 : vector<32x1xf32>
    %58 = math.rsqrt %57 : vector<32x1xf32>
    %59 = vector.broadcast %58 : vector<32x1xf32> to vector<32x256xf32>
    %60 = arith.mulf %47, %59 : vector<32x256xf32>
    %61 = arith.mulf %48, %48 : vector<32x256xf32>
    %cst_29 = arith.constant dense<0.000000e+00> : vector<32xf32>
    %62 = vector.multi_reduction <add>, %61, %cst_29 [1] : vector<32x256xf32> to vector<32xf32>
    %63 = vector.shape_cast %62 : vector<32xf32> to vector<32x1xf32>
    %cst_30 = arith.constant 1.000000e-24 : f32
    %64 = vector.broadcast %cst_30 : f32 to vector<32x1xf32>
    %65 = arith.maximumf %63, %64 : vector<32x1xf32>
    %66 = math.rsqrt %65 : vector<32x1xf32>
    %67 = vector.broadcast %66 : vector<32x1xf32> to vector<32x256xf32>
    %68 = arith.mulf %48, %67 : vector<32x256xf32>
    %cst_31 = arith.constant dense<0.000000e+00> : vector<32x32xf32>
    %69 = tpu.matmul %60, %68, %cst_31 {dimension_numbers = #tpu.dot_dimension_numbers<[1], [1], [0], [0], [0, 0, 1, 0], [], []>} : vector<32x256xf32>, vector<32x256xf32>, vector<32x32xf32> -> vector<32x32xf32>
    %70 = arith.mulf %69, %1 : vector<32x32xf32>
    %71 = arith.addf %70, %2 : vector<32x32xf32>
    %cst_32 = arith.constant dense<0xFF800000> : vector<32xf32>
    %72 = vector.multi_reduction <maximumf>, %71, %cst_32 [1] : vector<32x32xf32> to vector<32xf32>
    %73 = vector.shape_cast %72 : vector<32xf32> to vector<32x1xf32>
    %74 = vector.broadcast %73 : vector<32x1xf32> to vector<32x32xf32>
    %75 = arith.subf %71, %74 : vector<32x32xf32>
    %76 = math.exp %75 : vector<32x32xf32>
    %cst_33 = arith.constant dense<0.000000e+00> : vector<32xf32>
    %77 = vector.multi_reduction <add>, %76, %cst_33 [1] : vector<32x32xf32> to vector<32xf32>
    %78 = vector.shape_cast %77 : vector<32xf32> to vector<32x1xf32>
    %79 = tpu.reciprocal %78 : vector<32x1xf32> -> vector<32x1xf32>
    %80 = vector.broadcast %79 : vector<32x1xf32> to vector<32x32xf32>
    %81 = arith.mulf %76, %80 : vector<32x32xf32>
    %c1_34 = arith.constant 1 : index
    %c0_35 = arith.constant 0 : index
    %c0_36 = arith.constant 0 : index
    %82 = vector.load %arg5[%c1_34, %c0_35, %c0_36] : memref<2x32x32xf32, #tpu.memory_space<vmem>>, vector<1x32x32xf32>
    %83 = vector.shape_cast %82 : vector<1x32x32xf32> to vector<32x32xf32>
    %84 = vector.shape_cast %81 : vector<32x32xf32> to vector<1x32x32xf32>
    tpu.vector_store %arg5[%c1_34, %c0_35, %c0_36], %84 {strides = array<i32>} : memref<2x32x32xf32, #tpu.memory_space<vmem>>, vector<1x32x32xf32>,
    return
  }
  func.func @transform_0(%arg0: i32) -> (i32, i32, i32) {
    %c0_i32 = arith.constant 0 : i32
    %c0_i32_0 = arith.constant 0 : i32
    %c0_i32_1 = arith.constant 0 : i32
    return %arg0, %c0_i32, %c0_i32_0 : i32, i32, i32
  }
  func.func @transform_1(%arg0: i32) -> (i32, i32) {
    %c0_i32 = arith.constant 0 : i32
    %c0_i32_0 = arith.constant 0 : i32
    %c0_i32_1 = arith.constant 0 : i32
    return %c0_i32, %c0_i32_0 : i32, i32
  }
  func.func @transform_2(%arg0: i32) -> (i32, i32) {
    %c0_i32 = arith.constant 0 : i32
    %c0_i32_0 = arith.constant 0 : i32
    %c0_i32_1 = arith.constant 0 : i32
    return %c0_i32, %c0_i32_0 : i32, i32
  }
  func.func @transform_3(%arg0: i32) -> (i32, i32) {
    %c0_i32 = arith.constant 0 : i32
    %c0_i32_0 = arith.constant 0 : i32
    %c0_i32_1 = arith.constant 0 : i32
    return %c0_i32, %c0_i32_0 : i32, i32
  }
  func.func @transform_4(%arg0: i32) -> (i32, i32, i32) {
    %c0_i32 = arith.constant 0 : i32
    %c0_i32_0 = arith.constant 0 : i32
    %c0_i32_1 = arith.constant 0 : i32
    return %arg0, %c0_i32, %c0_i32_0 : i32, i32, i32
  }
  func.func @transform_5(%arg0: i32) -> (i32, i32, i32) {
    %c0_i32 = arith.constant 0 : i32
    %c0_i32_0 = arith.constant 0 : i32
    %c0_i32_1 = arith.constant 0 : i32
    return %arg0, %c0_i32, %c0_i32_0 : i32, i32, i32
  }
}

</mosaic_0001>

<llo_original>
// kernel: spatio_temporal_mutual_attention.1
$region0: #{spatio_temporal_mutual_attention.1}
  #allocation0 [shape = 'u32[]', space=smem, size = 0x4, offset = 0x4, fixed_abs, tag = 'smem constant byte address 0x4 - core index']
  #allocation1 [shape = 'u32[72,128]{1,0:T(1,128)}', space=vmem, size = 0x9000, scoped, tag = 'internal scratch']
  %s0 = inlined_call_operand.vmem [shape: f32[2,65,256], index: 0, kind: input, shape index: {}]
  %s1 = inlined_call_operand.vmem [shape: f32[96,65], index: 1, kind: input, shape index: {}]
  %s2 = inlined_call_operand.vmem [shape: f32[32,32], index: 2, kind: input, shape index: {}]
  %s3 = inlined_call_operand.vmem [shape: f32[32,32], index: 3, kind: input, shape index: {}]
  %s4 = inlined_call_operand.vmem [shape: f32[2,32,32], index: 4, kind: output, shape index: {0}]
  %s5 = inlined_call_operand.hbm [shape: f32[2,32,256], index: 5, kind: output, shape index: {1}]
  %6 = xla_tuple %s4, %s5
  %s7 = sld [smem:[#allocation0]]
  $region34: #{spatio_temporal_mutual_attention.1} parent=0
    _
  %s9 = ssub.s32 1, %s7
  %s10 = scalar_select 0, %s9, %s7
  $region1: #{spatio_temporal_mutual_attention.1} parent=0
    #allocation2 [shape = 'u8[65536]{0}', space=vmem, size = 0x10000, scoped, tag = 'output window, operand 1, single buffered']
    #allocation3 [shape = 's32[1]{0}', space=sflag, size = 0x4, scoped, tag = 'scoped memory for spatio_temporal_mutual_attention.1']
    %11 = vsyncpa [#allocation3], 0
    // Predicated region
    $region2: #{spatio_temporal_mutual_attention.1} parent=1 // pred_check
      _
    $region3: #{spatio_temporal_mutual_attention.1} parent=1 // pred_check_branch
      %13 = sbr.rel (0) target = $region5
    $region4: #{spatio_temporal_mutual_attention.1} parent=1 // pred_region
      _
    $region5: #{spatio_temporal_mutual_attention.1} parent=1 // pred_fallthru
      _
    // Predicated region
    $region6: #{spatio_temporal_mutual_attention.1} parent=1 // pred_check
      _
    $region7: #{spatio_temporal_mutual_attention.1} parent=1 // pred_check_branch
      %15 = sbr.rel (0) target = $region9
    $region8: #{spatio_temporal_mutual_attention.1} parent=1 // pred_region
      _
    $region9: #{spatio_temporal_mutual_attention.1} parent=1 // pred_fallthru
      _
    // Predicated region
    $region10: #{spatio_temporal_mutual_attention.1} parent=1 // pred_check
      _
    $region11: #{spatio_temporal_mutual_attention.1} parent=1 // pred_check_branch
      %17 = sbr.rel (0) target = $region13
    $region12: #{spatio_temporal_mutual_attention.1} parent=1 // pred_region
      _
    $region13: #{spatio_temporal_mutual_attention.1} parent=1 // pred_fallthru
      _
    // Predicated region
    $region14: #{spatio_temporal_mutual_attention.1} parent=1 // pred_check
      _
    $region15: #{spatio_temporal_mutual_attention.1} parent=1 // pred_check_branch
      %19 = sbr.rel (0) target = $region17
    $region16: #{spatio_temporal_mutual_attention.1} parent=1 // pred_region
      _
    $region17: #{spatio_temporal_mutual_attention.1} parent=1 // pred_fallthru
      _
    %v20 = vld [vmem:[%s1] sm:$0xff]
    %v21 = vld [vmem:[%s1 + $0x8] sm:$0xff]
    %v22 = vld [vmem:[%s1 + $0x10] sm:$0xff]
    %v23 = vld [vmem:[%s1 + $0x18] sm:$0xff]
    %v24 = vld [vmem:[%s1 + $0x20] sm:$0xff]
    %v25 = vld [vmem:[%s1 + $0x28] sm:$0xff]
    %v26 = vld [vmem:[%s1 + $0x30] sm:$0xff]
    %v27 = vld [vmem:[%s1 + $0x38] sm:$0xff]
    %v28 = vld [vmem:[%s1 + $0x40] sm:$0xff]
    %v29 = vld [vmem:[%s1 + $0x48] sm:$0xff]
    %v30 = vld [vmem:[%s1 + $0x50] sm:$0xff]
    %v31 = vld [vmem:[%s1 + $0x58] sm:$0xff]
    %v32 = vld [vmem:[%s2] sm:$0xff]
    %v33 = vld [vmem:[%s2 + $0x8] sm:$0xff]
    %v34 = vld [vmem:[%s2 + $0x10] sm:$0xff]
    %v35 = vld [vmem:[%s2 + $0x18] sm:$0xff]
    %v36 = vld [vmem:[%s3] sm:$0xff]
    %v37 = vld [vmem:[%s3 + $0x8] sm:$0xff]
    %v38 = vld [vmem:[%s3 + $0x10] sm:$0xff]
    %v39 = vld [vmem:[%s3 + $0x18] sm:$0xff]
    %v40 = vld [vmem:[%s0] sm:$0xff]
    %v41 = vld [vmem:[%s0 + $0x8] sm:$0xff]
    %v42 = vld [vmem:[%s0 + $0x10] sm:$0xff]
    %v43 = vld [vmem:[%s0 + $0x18] sm:$0xff]
    %v44 = vld [vmem:[%s0 + $0x20] sm:$0xff]
    %v45 = vld [vmem:[%s0 + $0x28] sm:$0xff]
    %v46 = vld [vmem:[%s0 + $0x30] sm:$0xff]
    %v47 = vld [vmem:[%s0 + $0x38] sm:$0xff]
    %v48 = vld [vmem:[%s0 + $0x40] sm:$0xff]
    %v49 = vld [vmem:[%s0 + $0x48] sm:$0xff]
    %v50 = vld [vmem:[%s0 + $0x50] sm:$0xff]
    %v51 = vld [vmem:[%s0 + $0x58] sm:$0xff]
    %v52 = vld [vmem:[%s0 + $0x60] sm:$0xff]
    %v53 = vld [vmem:[%s0 + $0x68] sm:$0xff]
    %v54 = vld [vmem:[%s0 + $0x70] sm:$0xff]
    %v55 = vld [vmem:[%s0 + $0x78] sm:$0xff]
    %v56 = vld [vmem:[%s0 + $0x80] sm:$0x1]
    %v57 = vld [vmem:[%s0 + $0x88] sm:$0x1]
    %vm58 = vcmask 531456
    %v60 = vsel %vm58, %v20, 0
    %v63 = vsel %vm58, %v21, 0
    %v66 = vsel %vm58, %v22, 0
    %v69 = vsel %vm58, %v23, 0
    %v72 = vsel %vm58, %v24, 0
    %v75 = vsel %vm58, %v25, 0
    %v78 = vsel %vm58, %v26, 0
    %v81 = vsel %vm58, %v27, 0
    %v84 = vsel %vm58, %v28, 0
    %v87 = vsel %vm58, %v29, 0
    %v90 = vsel %vm58, %v30, 0
    %v93 = vsel %vm58, %v31, 0
    %vm95 = vcmask 1040384
    %v97 = vsel %vm95, %v56, 0
    %v100 = vsel %vm95, %v57, 0
    %102 = vmatpush.msra.mxu0 0.0
    %103 = vmatpush.msra.mxu0 0.0
    %104 = vmatpush.msra.mxu0 0.0
    %105 = vmatpush.msra.mxu0 0.0
    %106 = vmatpush.msra.mxu0 0.0
    %107 = vmatpush.msra.mxu0 0.0
    %108 = vmatpush.msra.mxu0 0.0
    %109 = vmatpush.msra.mxu0 %v97
    %110 = vmatpush.msra.mxu0 %v54
    %111 = vmatpush.msra.mxu0 %v52
    %112 = vmatpush.msra.mxu0 %v50
    %113 = vmatpush.msra.mxu0 %v48
    %114 = vmatpush.msra.mxu0 %v46
    %115 = vmatpush.msra.mxu0 %v44
    %116 = vmatpush.msra.mxu0 %v42
    %117 = vmatpush.msra.mxu0 %v40
    %118 = vmatmul.f32.gmra.mxu0 %v60
    %v119 = vpop.f32.mrf.mxu0
    %v120 = vadd.f32 0.0, %v119
    %121 = vmatmul.f32.gmra.mxu0 %v63
    %v122 = vpop.f32.mrf.mxu0
    %v123 = vadd.f32 0.0, %v122
    %124 = vmatmul.f32.gmra.mxu0 %v66
    %v125 = vpop.f32.mrf.mxu0
    %v126 = vadd.f32 0.0, %v125
    %127 = vmatmul.f32.gmra.mxu0 %v69
    %v128 = vpop.f32.mrf.mxu0
    %v129 = vadd.f32 0.0, %v128
    %130 = vmatmul.f32.gmra.mxu0 %v72
    %v131 = vpop.f32.mrf.mxu0
    %v132 = vadd.f32 0.0, %v131
    %133 = vmatmul.f32.gmra.mxu0 %v75
    %v134 = vpop.f32.mrf.mxu0
    %v135 = vadd.f32 0.0, %v134
    %136 = vmatmul.f32.gmra.mxu0 %v78
    %v137 = vpop.f32.mrf.mxu0
    %v138 = vadd.f32 0.0, %v137
    %139 = vmatmul.f32.gmra.mxu0 %v81
    %v140 = vpop.f32.mrf.mxu0
    %v141 = vadd.f32 0.0, %v140
    %142 = vmatmul.f32.gmra.mxu0 %v84
    %v143 = vpop.f32.mrf.mxu0
    %v144 = vadd.f32 0.0, %v143
    %145 = vmatmul.f32.gmra.mxu0 %v87
    %v146 = vpop.f32.mrf.mxu0
    %v147 = vadd.f32 0.0, %v146
    %148 = vmatmul.f32.gmra.mxu0 %v90
    %v149 = vpop.f32.mrf.mxu0
    %v150 = vadd.f32 0.0, %v149
    %151 = vmatmul.f32.gmra.mxu0 %v93
    %v152 = vpop.f32.mrf.mxu0
    %v153 = vadd.f32 0.0, %v152
    %154 = vdwg.mxu0
    %155 = vmatpush.msra.mxu0 0.0
    %156 = vmatpush.msra.mxu0 0.0
    %157 = vmatpush.msra.mxu0 0.0
    %158 = vmatpush.msra.mxu0 0.0
    %159 = vmatpush.msra.mxu0 0.0
    %160 = vmatpush.msra.mxu0 0.0
    %161 = vmatpush.msra.mxu0 0.0
    %162 = vmatpush.msra.mxu0 %v100
    %163 = vmatpush.msra.mxu0 %v55
    %164 = vmatpush.msra.mxu0 %v53
    %165 = vmatpush.msra.mxu0 %v51
    %166 = vmatpush.msra.mxu0 %v49
    %167 = vmatpush.msra.mxu0 %v47
    %168 = vmatpush.msra.mxu0 %v45
    %169 = vmatpush.msra.mxu0 %v43
    %170 = vmatpush.msra.mxu0 %v41
    %171 = vmatmul.f32.gmra.mxu0 %v60
    %v172 = vpop.f32.mrf.mxu0
    %v173 = vadd.f32 0.0, %v172
    %174 = vmatmul.f32.gmra.mxu0 %v63
    %v175 = vpop.f32.mrf.mxu0
    %v176 = vadd.f32 0.0, %v175
    %177 = vmatmul.f32.gmra.mxu0 %v66
    %v178 = vpop.f32.mrf.mxu0
    %v179 = vadd.f32 0.0, %v178
    %180 = vmatmul.f32.gmra.mxu0 %v69
    %v181 = vpop.f32.mrf.mxu0
    %v182 = vadd.f32 0.0, %v181
    %183 = vmatmul.f32.gmra.mxu0 %v72
    %v184 = vpop.f32.mrf.mxu0
    %v185 = vadd.f32 0.0, %v184
    %186 = vmatmul.f32.gmra.mxu0 %v75
    %v187 = vpop.f32.mrf.mxu0
    %v188 = vadd.f32 0.0, %v187
    %189 = vmatmul.f32.gmra.mxu0 %v78
    %v190 = vpop.f32.mrf.mxu0
    %v191 = vadd.f32 0.0, %v190
    %192 = vmatmul.f32.gmra.mxu0 %v81
    %v193 = vpop.f32.mrf.mxu0
    %v194 = vadd.f32 0.0, %v193
    %195 = vmatmul.f32.gmra.mxu0 %v84
    %v196 = vpop.f32.mrf.mxu0
    %v197 = vadd.f32 0.0, %v196
    %198 = vmatmul.f32.gmra.mxu0 %v87
    %v199 = vpop.f32.mrf.mxu0
    %v200 = vadd.f32 0.0, %v199
    %201 = vmatmul.f32.gmra.mxu0 %v90
    %v202 = vpop.f32.mrf.mxu0
    %v203 = vadd.f32 0.0, %v202
    %204 = vmatmul.f32.gmra.mxu0 %v93
    %v205 = vpop.f32.mrf.mxu0
    %v206 = vadd.f32 0.0, %v205
    %207 = vdwg.mxu0
    %208 = vst [vmem:[#allocation2] sm:$0xff] %v144
    %209 = vst [vmem:[#allocation2 + $0x8] sm:$0xff] %v197
    %210 = vst [vmem:[#allocation2 + $0x10] sm:$0xff] %v147
    %211 = vst [vmem:[#allocation2 + $0x18] sm:$0xff] %v200
    %212 = vst [vmem:[#allocation2 + $0x20] sm:$0xff] %v150
    %213 = vst [vmem:[#allocation2 + $0x28] sm:$0xff] %v203
    %214 = vst [vmem:[#allocation2 + $0x30] sm:$0xff] %v153
    %215 = vst [vmem:[#allocation2 + $0x38] sm:$0xff] %v206
    %v216 = vmul.f32 %v120, %v120
    %v217 = vmul.f32 %v173, %v173
    %v218 = vmul.f32 %v123, %v123
    %v219 = vmul.f32 %v176, %v176
    %v220 = vmul.f32 %v126, %v126
    %v221 = vmul.f32 %v179, %v179
    %v222 = vmul.f32 %v129, %v129
    %v223 = vmul.f32 %v182, %v182
    %v224 = vadd.f32 %v216, %v217
    %225 = vadd.xlane.f32.xlu0 %v224
    %v226 = vpop.xlane.xlu0 %225
    %v227 = vadd.f32 %v218, %v219
    %228 = vadd.xlane.f32.xlu0 %v227
    %v229 = vpop.xlane.xlu0 %228
    %v230 = vadd.f32 %v220, %v221
    %231 = vadd.xlane.f32.xlu0 %v230
    %v232 = vpop.xlane.xlu0 %231
    %v233 = vadd.f32 %v222, %v223
    %234 = vadd.xlane.f32.xlu0 %v233
    %v235 = vpop.xlane.xlu0 %234
    %v236 = vmax.f32 %v226, 1e-24
    %v237 = vmax.f32 %v229, 1e-24
    %v238 = vmax.f32 %v232, 1e-24
    %v239 = vmax.f32 %v235, 1e-24
    %v240 = vrsqrt.pop %v236
    %v241 = vmul.f32 %v240, %v236
    %v242 = vmul.f32 %v241, %v240
    %v243 = vmul.f32 0.5, %v242
    %v244 = vsub.f32 1.5, %v243
    %v245 = vmul.f32 %v240, %v244
    %vm246 = vweird.f32 %v236
    %vm247 = vweird.f32 %v240
    %vm248 = vmor %vm246, %vm247
    %v249 = vsel %vm248, %v240, %v245
    %v250 = vrsqrt.pop %v237
    %v251 = vmul.f32 %v250, %v237
    %v252 = vmul.f32 %v251, %v250
    %v253 = vmul.f32 0.5, %v252
    %v254 = vsub.f32 1.5, %v253
    %v255 = vmul.f32 %v250, %v254
    %vm256 = vweird.f32 %v237
    %vm257 = vweird.f32 %v250
    %vm258 = vmor %vm256, %vm257
    %v259 = vsel %vm258, %v250, %v255
    %v260 = vrsqrt.pop %v238
    %v261 = vmul.f32 %v260, %v238
    %v262 = vmul.f32 %v261, %v260
    %v263 = vmul.f32 0.5, %v262
    %v264 = vsub.f32 1.5, %v263
    %v265 = vmul.f32 %v260, %v264
    %vm266 = vweird.f32 %v238
    %vm267 = vweird.f32 %v260
    %vm268 = vmor %vm266, %vm267
    %v269 = vsel %vm268, %v260, %v265
    %v270 = vrsqrt.pop %v239
    %v271 = vmul.f32 %v270, %v239
    %v272 = vmul.f32 %v271, %v270
    %v273 = vmul.f32 0.5, %v272
    %v274 = vsub.f32 1.5, %v273
    %v275 = vmul.f32 %v270, %v274
    %vm276 = vweird.f32 %v239
    %vm277 = vweird.f32 %v270
    %vm278 = vmor %vm276, %vm277
    %v279 = vsel %vm278, %v270, %v275
    %v280 = vmul.f32 %v120, %v249
    %v281 = vmul.f32 %v173, %v249
    %v282 = vmul.f32 %v123, %v259
    %v283 = vmul.f32 %v176, %v259
    %v284 = vmul.f32 %v126, %v269
    %v285 = vmul.f32 %v179, %v269
    %v286 = vmul.f32 %v129, %v279
    %v287 = vmul.f32 %v182, %v279
    %v288 = vmul.f32 %v132, %v132
    %v289 = vmul.f32 %v185, %v185
    %v290 = vmul.f32 %v135, %v135
    %v291 = vmul.f32 %v188, %v188
    %v292 = vmul.f32 %v138, %v138
    %v293 = vmul.f32 %v191, %v191
    %v294 = vmul.f32 %v141, %v141
    %v295 = vmul.f32 %v194, %v194
    %v296 = vadd.f32 %v288, %v289
    %297 = vadd.xlane.f32.xlu0 %v296
    %v298 = vpop.xlane.xlu0 %297
    %v299 = vadd.f32 %v290, %v291
    %300 = vadd.xlane.f32.xlu0 %v299
    %v301 = vpop.xlane.xlu0 %300
    %v302 = vadd.f32 %v292, %v293
    %303 = vadd.xlane.f32.xlu0 %v302
    %v304 = vpop.xlane.xlu0 %303
    %v305 = vadd.f32 %v294, %v295
    %306 = vadd.xlane.f32.xlu0 %v305
    %v307 = vpop.xlane.xlu0 %306
    %v308 = vmax.f32 %v298, 1e-24
    %v309 = vmax.f32 %v301, 1e-24
    %v310 = vmax.f32 %v304, 1e-24
    %v311 = vmax.f32 %v307, 1e-24
    %v312 = vrsqrt.pop %v308
    %v313 = vmul.f32 %v312, %v308
    %v314 = vmul.f32 %v313, %v312
    %v315 = vmul.f32 0.5, %v314
    %v316 = vsub.f32 1.5, %v315
    %v317 = vmul.f32 %v312, %v316
    %vm318 = vweird.f32 %v308
    %vm319 = vweird.f32 %v312
    %vm320 = vmor %vm318, %vm319
    %v321 = vsel %vm320, %v312, %v317
    %v322 = vrsqrt.pop %v309
    %v323 = vmul.f32 %v322, %v309
    %v324 = vmul.f32 %v323, %v322
    %v325 = vmul.f32 0.5, %v324
    %v326 = vsub.f32 1.5, %v325
    %v327 = vmul.f32 %v322, %v326
    %vm328 = vweird.f32 %v309
    %vm329 = vweird.f32 %v322
    %vm330 = vmor %vm328, %vm329
    %v331 = vsel %vm330, %v322, %v327
    %v332 = vrsqrt.pop %v310
    %v333 = vmul.f32 %v332, %v310
    %v334 = vmul.f32 %v333, %v332
    %v335 = vmul.f32 0.5, %v334
    %v336 = vsub.f32 1.5, %v335
    %v337 = vmul.f32 %v332, %v336
    %vm338 = vweird.f32 %v310
    %vm339 = vweird.f32 %v332
    %vm340 = vmor %vm338, %vm339
    %v341 = vsel %vm340, %v332, %v337
    %v342 = vrsqrt.pop %v311
    %v343 = vmul.f32 %v342, %v311
    %v344 = vmul.f32 %v343, %v342
    %v345 = vmul.f32 0.5, %v344
    %v346 = vsub.f32 1.5, %v345
    %v347 = vmul.f32 %v342, %v346
    %vm348 = vweird.f32 %v311
    %vm349 = vweird.f32 %v342
    %vm350 = vmor %vm348, %vm349
    %v351 = vsel %vm350, %v342, %v347
    %v352 = vmul.f32 %v132, %v321
    %v353 = vmul.f32 %v185, %v321
    %v354 = vmul.f32 %v135, %v331
    %v355 = vmul.f32 %v188, %v331
    %v356 = vmul.f32 %v138, %v341
    %v357 = vmul.f32 %v191, %v341
    %v358 = vmul.f32 %v141, %v351
    %v359 = vmul.f32 %v194, %v351
    %360 = vmatpush.xpose.msra.mxu0 0.0
    %361 = vmatpush.xpose.msra.mxu0 0.0
    %362 = vmatpush.xpose.msra.mxu0 0.0
    %363 = vmatpush.xpose.msra.mxu0 0.0
    %364 = vmatpush.xpose.msra.mxu0 0.0
    %365 = vmatpush.xpose.msra.mxu0 0.0
    %366 = vmatpush.xpose.msra.mxu0 0.0
    %367 = vmatpush.xpose.msra.mxu0 0.0
    %368 = vmatpush.xpose.msra.mxu0 0.0
    %369 = vmatpush.xpose.msra.mxu0 0.0
    %370 = vmatpush.xpose.msra.mxu0 0.0
    %371 = vmatpush.xpose.msra.mxu0 0.0
    %372 = vmatpush.xpose.msra.mxu0 %v358
    %373 = vmatpush.xpose.msra.mxu0 %v356
    %374 = vmatpush.xpose.msra.mxu0 %v354
    %375 = vmatpush.xpose.msra.mxu0 %v352
    %376 = vmatmul.f32.gmra.mxu0 %v280
    %v377 = vpop.f32.mrf.mxu0
    %v378 = vadd.f32 0.0, %v377
    %379 = vmatmul.f32.gmra.mxu0 %v282
    %v380 = vpop.f32.mrf.mxu0
    %v381 = vadd.f32 0.0, %v380
    %382 = vmatmul.f32.gmra.mxu0 %v284
    %v383 = vpop.f32.mrf.mxu0
    %v384 = vadd.f32 0.0, %v383
    %385 = vmatmul.f32.gmra.mxu0 %v286
    %v386 = vpop.f32.mrf.mxu0
    %v387 = vadd.f32 0.0, %v386
    %388 = vdwg.mxu0
    %389 = vmatpush.xpose.msra.mxu0 0.0
    %390 = vmatpush.xpose.msra.mxu0 0.0
    %391 = vmatpush.xpose.msra.mxu0 0.0
    %392 = vmatpush.xpose.msra.mxu0 0.0
    %393 = vmatpush.xpose.msra.mxu0 0.0
    %394 = vmatpush.xpose.msra.mxu0 0.0
    %395 = vmatpush.xpose.msra.mxu0 0.0
    %396 = vmatpush.xpose.msra.mxu0 0.0
    %397 = vmatpush.xpose.msra.mxu0 0.0
    %398 = vmatpush.xpose.msra.mxu0 0.0
    %399 = vmatpush.xpose.msra.mxu0 0.0
    %400 = vmatpush.xpose.msra.mxu0 0.0
    %401 = vmatpush.xpose.msra.mxu0 %v359
    %402 = vmatpush.xpose.msra.mxu0 %v357
    %403 = vmatpush.xpose.msra.mxu0 %v355
    %404 = vmatpush.xpose.msra.mxu0 %v353
    %405 = vmatmul.f32.gmra.mxu0 %v281
    %v406 = vpop.f32.mrf.mxu0
    %v407 = vadd.f32 %v378, %v406
    %408 = vmatmul.f32.gmra.mxu0 %v283
    %v409 = vpop.f32.mrf.mxu0
    %v410 = vadd.f32 %v381, %v409
    %411 = vmatmul.f32.gmra.mxu0 %v285
    %v412 = vpop.f32.mrf.mxu0
    %v413 = vadd.f32 %v384, %v412
    %414 = vmatmul.f32.gmra.mxu0 %v287
    %v415 = vpop.f32.mrf.mxu0
    %v416 = vadd.f32 %v387, %v415
    %417 = vdwg.mxu0
    %v418 = vmul.f32 %v407, %v32
    %v419 = vmul.f32 %v410, %v33
    %v420 = vmul.f32 %v413, %v34
    %v421 = vmul.f32 %v416, %v35
    %v422 = vadd.f32 %v418, %v36
    %v423 = vadd.f32 %v419, %v37
    %v424 = vadd.f32 %v420, %v38
    %v425 = vadd.f32 %v421, %v39
    %vm426 = vcmask 261120
    %v427 = vsel %vm426, %v422, -inf
    %428 = vmax.xlane.f32.xlu0 %v427
    %v429 = vpop.xlane.xlu0 %428
    %v430 = vsel %vm426, %v423, -inf
    %431 = vmax.xlane.f32.xlu0 %v430
    %v432 = vpop.xlane.xlu0 %431
    %v433 = vsel %vm426, %v424, -inf
    %434 = vmax.xlane.f32.xlu0 %v433
    %v435 = vpop.xlane.xlu0 %434
    %v436 = vsel %vm426, %v425, -inf
    %437 = vmax.xlane.f32.xlu0 %v436
    %v438 = vpop.xlane.xlu0 %437
    %v439 = vsub.f32 %v422, %v429
    %v440 = vsub.f32 %v423, %v432
    %v441 = vsub.f32 %v424, %v435
    %v442 = vsub.f32 %v425, %v438
    %v443 = vmul.f32 %v439, 1.442695
    %v444 = vpow.pop %v443
    %v445 = vmul.f32 %v440, 1.442695
    %v446 = vpow.pop %v445
    %v447 = vmul.f32 %v441, 1.442695
    %v448 = vpow.pop %v447
    %v449 = vmul.f32 %v442, 1.442695
    %v450 = vpow.pop %v449
    %v451 = vsel %vm426, %v444, 0.0
    %452 = vadd.xlane.f32.xlu0 %v451
    %v453 = vpop.xlane.xlu0 %452
    %v454 = vsel %vm426, %v446, 0.0
    %455 = vadd.xlane.f32.xlu0 %v454
    %v456 = vpop.xlane.xlu0 %455
    %v457 = vsel %vm426, %v448, 0.0
    %458 = vadd.xlane.f32.xlu0 %v457
    %v459 = vpop.xlane.xlu0 %458
    %v460 = vsel %vm426, %v450, 0.0
    %461 = vadd.xlane.f32.xlu0 %v460
    %v462 = vpop.xlane.xlu0 %461
    %v463 = vrcp.pop %v453
    %v464 = vmul.f32 %v453, %v463
    %v465 = vsub.f32 1.0, %v464
    %v466 = vmul.f32 %v463, %v465
    %v467 = vadd.f32 %v463, %v466
    %vm468 = vweird.f32 %v453
    %vm469 = vweird.f32 %v463
    %vm470 = vmor %vm468, %vm469
    %v471 = vsel %vm470, %v463, %v467
    %v472 = vand.u32 2147483647, %v453
    %vm473 = vcmp.eq.f32.partialorder %v472, 8.507059e+37
    %v474 = vand.u32 %v453, 2147483648
    %v475 = vor.u32 1.1754944e-38, %v474
    %v476 = vsel %vm473, %v475, %v471
    %v477 = vrcp.pop %v456
    %v478 = vmul.f32 %v456, %v477
    %v479 = vsub.f32 1.0, %v478
    %v480 = vmul.f32 %v477, %v479
    %v481 = vadd.f32 %v477, %v480
    %vm482 = vweird.f32 %v456
    %vm483 = vweird.f32 %v477
    %vm484 = vmor %vm482, %vm483
    %v485 = vsel %vm484, %v477, %v481
    %v486 = vand.u32 2147483647, %v456
    %vm487 = vcmp.eq.f32.partialorder %v486, 8.507059e+37
    %v488 = vand.u32 %v456, 2147483648
    %v489 = vor.u32 1.1754944e-38, %v488
    %v490 = vsel %vm487, %v489, %v485
    %v491 = vrcp.pop %v459
    %v492 = vmul.f32 %v459, %v491
    %v493 = vsub.f32 1.0, %v492
    %v494 = vmul.f32 %v491, %v493
    %v495 = vadd.f32 %v491, %v494
    %vm496 = vweird.f32 %v459
    %vm497 = vweird.f32 %v491
    %vm498 = vmor %vm496, %vm497
    %v499 = vsel %vm498, %v491, %v495
    %v500 = vand.u32 2147483647, %v459
    %vm501 = vcmp.eq.f32.partialorder %v500, 8.507059e+37
    %v502 = vand.u32 %v459, 2147483648
    %v503 = vor.u32 1.1754944e-38, %v502
    %v504 = vsel %vm501, %v503, %v499
    %v505 = vrcp.pop %v462
    %v506 = vmul.f32 %v462, %v505
    %v507 = vsub.f32 1.0, %v506
    %v508 = vmul.f32 %v505, %v507
    %v509 = vadd.f32 %v505, %v508
    %vm510 = vweird.f32 %v462
    %vm511 = vweird.f32 %v505
    %vm512 = vmor %vm510, %vm511
    %v513 = vsel %vm512, %v505, %v509
    %v514 = vand.u32 2147483647, %v462
    %vm515 = vcmp.eq.f32.partialorder %v514, 8.507059e+37
    %v516 = vand.u32 %v462, 2147483648
    %v517 = vor.u32 1.1754944e-38, %v516
    %v518 = vsel %vm515, %v517, %v513
    %v519 = vmul.f32 %v444, %v476
    %v520 = vmul.f32 %v446, %v490
    %v521 = vmul.f32 %v448, %v504
    %v522 = vmul.f32 %v450, %v518
    %523 = vst.msk [vmem:[%s4] sm:$0xff] %vm426, %v519
    %524 = vst.msk [vmem:[%s4 + $0x8] sm:$0xff] %vm426, %v520
    %525 = vst.msk [vmem:[%s4 + $0x10] sm:$0xff] %vm426, %v521
    %526 = vst.msk [vmem:[%s4 + $0x18] sm:$0xff] %vm426, %v522
    %s527 = scalar_lea.vmem %s0, 144
    %v528 = vld [vmem:[%s527] sm:$0xff]
    %v529 = vld [vmem:[%s527 + $0x8] sm:$0xff]
    %v530 = vld [vmem:[%s527 + $0x10] sm:$0xff]
    %v531 = vld [vmem:[%s527 + $0x18] sm:$0xff]
    %v532 = vld [vmem:[%s527 + $0x20] sm:$0xff]
    %v533 = vld [vmem:[%s527 + $0x28] sm:$0xff]
    %v534 = vld [vmem:[%s527 + $0x30] sm:$0xff]
    %v535 = vld [vmem:[%s527 + $0x38] sm:$0xff]
    %v536 = vld [vmem:[%s527 + $0x40] sm:$0xff]
    %v537 = vld [vmem:[%s527 + $0x48] sm:$0xff]
    %v538 = vld [vmem:[%s527 + $0x50] sm:$0xff]
    %v539 = vld [vmem:[%s527 + $0x58] sm:$0xff]
    %v540 = vld [vmem:[%s527 + $0x60] sm:$0xff]
    %v541 = vld [vmem:[%s527 + $0x68] sm:$0xff]
    %v542 = vld [vmem:[%s527 + $0x70] sm:$0xff]
    %v543 = vld [vmem:[%s527 + $0x78] sm:$0xff]
    %v544 = vld [vmem:[%s527 + $0x80] sm:$0x1]
    %v545 = vld [vmem:[%s527 + $0x88] sm:$0x1]
    %v547 = vsel %vm95, %v544, 0
    %v550 = vsel %vm95, %v545, 0
    %552 = vmatpush.msra.mxu0 0.0
    %553 = vmatpush.msra.mxu0 0.0
    %554 = vmatpush.msra.mxu0 0.0
    %555 = vmatpush.msra.mxu0 0.0
    %556 = vmatpush.msra.mxu0 0.0
    %557 = vmatpush.msra.mxu0 0.0
    %558 = vmatpush.msra.mxu0 0.0
    %559 = vmatpush.msra.mxu0 %v547
    %560 = vmatpush.msra.mxu0 %v542
    %561 = vmatpush.msra.mxu0 %v540
    %562 = vmatpush.msra.mxu0 %v538
    %563 = vmatpush.msra.mxu0 %v536
    %564 = vmatpush.msra.mxu0 %v534
    %565 = vmatpush.msra.mxu0 %v532
    %566 = vmatpush.msra.mxu0 %v530
    %567 = vmatpush.msra.mxu0 %v528
    %568 = vmatmul.f32.gmra.mxu0 %v60
    %v569 = vpop.f32.mrf.mxu0
    %v570 = vadd.f32 0.0, %v569
    %571 = vmatmul.f32.gmra.mxu0 %v63
    %v572 = vpop.f32.mrf.mxu0
    %v573 = vadd.f32 0.0, %v572
    %574 = vmatmul.f32.gmra.mxu0 %v66
    %v575 = vpop.f32.mrf.mxu0
    %v576 = vadd.f32 0.0, %v575
    %577 = vmatmul.f32.gmra.mxu0 %v69
    %v578 = vpop.f32.mrf.mxu0
    %v579 = vadd.f32 0.0, %v578
    %580 = vmatmul.f32.gmra.mxu0 %v72
    %v581 = vpop.f32.mrf.mxu0
    %v582 = vadd.f32 0.0, %v581
    %583 = vmatmul.f32.gmra.mxu0 %v75
    %v584 = vpop.f32.mrf.mxu0
    %v585 = vadd.f32 0.0, %v584
    %586 = vmatmul.f32.gmra.mxu0 %v78
    %v587 = vpop.f32.mrf.mxu0
    %v588 = vadd.f32 0.0, %v587
    %589 = vmatmul.f32.gmra.mxu0 %v81
    %v590 = vpop.f32.mrf.mxu0
    %v591 = vadd.f32 0.0, %v590
    %592 = vmatmul.f32.gmra.mxu0 %v84
    %v593 = vpop.f32.mrf.mxu0
    %v594 = vadd.f32 0.0, %v593
    %595 = vmatmul.f32.gmra.mxu0 %v87
    %v596 = vpop.f32.mrf.mxu0
    %v597 = vadd.f32 0.0, %v596
    %598 = vmatmul.f32.gmra.mxu0 %v90
    %v599 = vpop.f32.mrf.mxu0
    %v600 = vadd.f32 0.0, %v599
    %601 = vmatmul.f32.gmra.mxu0 %v93
    %v602 = vpop.f32.mrf.mxu0
    %v603 = vadd.f32 0.0, %v602
    %604 = vdwg.mxu0
    %605 = vmatpush.msra.mxu0 0.0
    %606 = vmatpush.msra.mxu0 0.0
    %607 = vmatpush.msra.mxu0 0.0
    %608 = vmatpush.msra.mxu0 0.0
    %609 = vmatpush.msra.mxu0 0.0
    %610 = vmatpush.msra.mxu0 0.0
    %611 = vmatpush.msra.mxu0 0.0
    %612 = vmatpush.msra.mxu0 %v550
    %613 = vmatpush.msra.mxu0 %v543
    %614 = vmatpush.msra.mxu0 %v541
    %615 = vmatpush.msra.mxu0 %v539
    %616 = vmatpush.msra.mxu0 %v537
    %617 = vmatpush.msra.mxu0 %v535
    %618 = vmatpush.msra.mxu0 %v533
    %619 = vmatpush.msra.mxu0 %v531
    %620 = vmatpush.msra.mxu0 %v529
    %621 = vmatmul.f32.gmra.mxu0 %v60
    %v622 = vpop.f32.mrf.mxu0
    %v623 = vadd.f32 0.0, %v622
    %624 = vmatmul.f32.gmra.mxu0 %v63
    %v625 = vpop.f32.mrf.mxu0
    %v626 = vadd.f32 0.0, %v625
    %627 = vmatmul.f32.gmra.mxu0 %v66
    %v628 = vpop.f32.mrf.mxu0
    %v629 = vadd.f32 0.0, %v628
    %630 = vmatmul.f32.gmra.mxu0 %v69
    %v631 = vpop.f32.mrf.mxu0
    %v632 = vadd.f32 0.0, %v631
    %633 = vmatmul.f32.gmra.mxu0 %v72
    %v634 = vpop.f32.mrf.mxu0
    %v635 = vadd.f32 0.0, %v634
    %636 = vmatmul.f32.gmra.mxu0 %v75
    %v637 = vpop.f32.mrf.mxu0
    %v638 = vadd.f32 0.0, %v637
    %639 = vmatmul.f32.gmra.mxu0 %v78
    %v640 = vpop.f32.mrf.mxu0
    %v641 = vadd.f32 0.0, %v640
    %642 = vmatmul.f32.gmra.mxu0 %v81
    %v643 = vpop.f32.mrf.mxu0
    %v644 = vadd.f32 0.0, %v643
    %645 = vmatmul.f32.gmra.mxu0 %v84
    %v646 = vpop.f32.mrf.mxu0
    %v647 = vadd.f32 0.0, %v646
    %648 = vmatmul.f32.gmra.mxu0 %v87
    %v649 = vpop.f32.mrf.mxu0
    %v650 = vadd.f32 0.0, %v649
    %651 = vmatmul.f32.gmra.mxu0 %v90
    %v652 = vpop.f32.mrf.mxu0
    %v653 = vadd.f32 0.0, %v652
    %654 = vmatmul.f32.gmra.mxu0 %v93
    %v655 = vpop.f32.mrf.mxu0
    %v656 = vadd.f32 0.0, %v655
    %657 = vdwg.mxu0
    %s658 = scalar_lea.vmem [#allocation2], 64
    %659 = vst [vmem:[%s658] sm:$0xff] %v594
    %660 = vst [vmem:[%s658 + $0x8] sm:$0xff] %v647
    %661 = vst [vmem:[%s658 + $0x10] sm:$0xff] %v597
    %662 = vst [vmem:[%s658 + $0x18] sm:$0xff] %v650
    %663 = vst [vmem:[%s658 + $0x20] sm:$0xff] %v600
    %664 = vst [vmem:[%s658 + $0x28] sm:$0xff] %v653
    %665 = vst [vmem:[%s658 + $0x30] sm:$0xff] %v603
    %666 = vst [vmem:[%s658 + $0x38] sm:$0xff] %v656
    %v667 = vmul.f32 %v570, %v570
    %v668 = vmul.f32 %v623, %v623
    %v669 = vmul.f32 %v573, %v573
    %v670 = vmul.f32 %v626, %v626
    %v671 = vmul.f32 %v576, %v576
    %v672 = vmul.f32 %v629, %v629
    %v673 = vmul.f32 %v579, %v579
    %v674 = vmul.f32 %v632, %v632
    %v675 = vadd.f32 %v667, %v668
    %676 = vadd.xlane.f32.xlu0 %v675
    %v677 = vpop.xlane.xlu0 %676
    %v678 = vadd.f32 %v669, %v670
    %679 = vadd.xlane.f32.xlu0 %v678
    %v680 = vpop.xlane.xlu0 %679
    %v681 = vadd.f32 %v671, %v672
    %682 = vadd.xlane.f32.xlu0 %v681
    %v683 = vpop.xlane.xlu0 %682
    %v684 = vadd.f32 %v673, %v674
    %685 = vadd.xlane.f32.xlu0 %v684
    %v686 = vpop.xlane.xlu0 %685
    %v687 = vmax.f32 %v677, 1e-24
    %v688 = vmax.f32 %v680, 1e-24
    %v689 = vmax.f32 %v683, 1e-24
    %v690 = vmax.f32 %v686, 1e-24
    %v691 = vrsqrt.pop %v687
    %v692 = vmul.f32 %v691, %v687
    %v693 = vmul.f32 %v692, %v691
    %v694 = vmul.f32 0.5, %v693
    %v695 = vsub.f32 1.5, %v694
    %v696 = vmul.f32 %v691, %v695
    %vm697 = vweird.f32 %v687
    %vm698 = vweird.f32 %v691
    %vm699 = vmor %vm697, %vm698
    %v700 = vsel %vm699, %v691, %v696
    %v701 = vrsqrt.pop %v688
    %v702 = vmul.f32 %v701, %v688
    %v703 = vmul.f32 %v702, %v701
    %v704 = vmul.f32 0.5, %v703
    %v705 = vsub.f32 1.5, %v704
    %v706 = vmul.f32 %v701, %v705
    %vm707 = vweird.f32 %v688
    %vm708 = vweird.f32 %v701
    %vm709 = vmor %vm707, %vm708
    %v710 = vsel %vm709, %v701, %v706
    %v711 = vrsqrt.pop %v689
    %v712 = vmul.f32 %v711, %v689
    %v713 = vmul.f32 %v712, %v711
    %v714 = vmul.f32 0.5, %v713
    %v715 = vsub.f32 1.5, %v714
    %v716 = vmul.f32 %v711, %v715
    %vm717 = vweird.f32 %v689
    %vm718 = vweird.f32 %v711
    %vm719 = vmor %vm717, %vm718
    %v720 = vsel %vm719, %v711, %v716
    %v721 = vrsqrt.pop %v690
    %v722 = vmul.f32 %v721, %v690
    %v723 = vmul.f32 %v722, %v721
    %v724 = vmul.f32 0.5, %v723
    %v725 = vsub.f32 1.5, %v724
    %v726 = vmul.f32 %v721, %v725
    %vm727 = vweird.f32 %v690
    %vm728 = vweird.f32 %v721
    %vm729 = vmor %vm727, %vm728
    %v730 = vsel %vm729, %v721, %v726
    %v731 = vmul.f32 %v570, %v700
    %v732 = vmul.f32 %v623, %v700
    %v733 = vmul.f32 %v573, %v710
    %v734 = vmul.f32 %v626, %v710
    %v735 = vmul.f32 %v576, %v720
    %v736 = vmul.f32 %v629, %v720
    %v737 = vmul.f32 %v579, %v730
    %v738 = vmul.f32 %v632, %v730
    %v739 = vmul.f32 %v582, %v582
    %v740 = vmul.f32 %v635, %v635
    %v741 = vmul.f32 %v585, %v585
    %v742 = vmul.f32 %v638, %v638
    %v743 = vmul.f32 %v588, %v588
    %v744 = vmul.f32 %v641, %v641
    %v745 = vmul.f32 %v591, %v591
    %v746 = vmul.f32 %v644, %v644
    %v747 = vadd.f32 %v739, %v740
    %748 = vadd.xlane.f32.xlu0 %v747
    %v749 = vpop.xlane.xlu0 %748
    %v750 = vadd.f32 %v741, %v742
    %751 = vadd.xlane.f32.xlu0 %v750
    %v752 = vpop.xlane.xlu0 %751
    %v753 = vadd.f32 %v743, %v744
    %754 = vadd.xlane.f32.xlu0 %v753
    %v755 = vpop.xlane.xlu0 %754
    %v756 = vadd.f32 %v745, %v746
    %757 = vadd.xlane.f32.xlu0 %v756
    %v758 = vpop.xlane.xlu0 %757
    %v759 = vmax.f32 %v749, 1e-24
    %v760 = vmax.f32 %v752, 1e-24
    %v761 = vmax.f32 %v755, 1e-24
    %v762 = vmax.f32 %v758, 1e-24
    %v763 = vrsqrt.pop %v759
    %v764 = vmul.f32 %v763, %v759
    %v765 = vmul.f32 %v764, %v763
    %v766 = vmul.f32 0.5, %v765
    %v767 = vsub.f32 1.5, %v766
    %v768 = vmul.f32 %v763, %v767
    %vm769 = vweird.f32 %v759
    %vm770 = vweird.f32 %v763
    %vm771 = vmor %vm769, %vm770
    %v772 = vsel %vm771, %v763, %v768
    %v773 = vrsqrt.pop %v760
    %v774 = vmul.f32 %v773, %v760
    %v775 = vmul.f32 %v774, %v773
    %v776 = vmul.f32 0.5, %v775
    %v777 = vsub.f32 1.5, %v776
    %v778 = vmul.f32 %v773, %v777
    %vm779 = vweird.f32 %v760
    %vm780 = vweird.f32 %v773
    %vm781 = vmor %vm779, %vm780
    %v782 = vsel %vm781, %v773, %v778
    %v783 = vrsqrt.pop %v761
    %v784 = vmul.f32 %v783, %v761
    %v785 = vmul.f32 %v784, %v783
    %v786 = vmul.f32 0.5, %v785
    %v787 = vsub.f32 1.5, %v786
    %v788 = vmul.f32 %v783, %v787
    %vm789 = vweird.f32 %v761
    %vm790 = vweird.f32 %v783
    %vm791 = vmor %vm789, %vm790
    %v792 = vsel %vm791, %v783, %v788
    %v793 = vrsqrt.pop %v762
    %v794 = vmul.f32 %v793, %v762
    %v795 = vmul.f32 %v794, %v793
    %v796 = vmul.f32 0.5, %v795
    %v797 = vsub.f32 1.5, %v796
    %v798 = vmul.f32 %v793, %v797
    %vm799 = vweird.f32 %v762
    %vm800 = vweird.f32 %v793
    %vm801 = vmor %vm799, %vm800
    %v802 = vsel %vm801, %v793, %v798
    %v803 = vmul.f32 %v582, %v772
    %v804 = vmul.f32 %v635, %v772
    %v805 = vmul.f32 %v585, %v782
    %v806 = vmul.f32 %v638, %v782
    %v807 = vmul.f32 %v588, %v792
    %v808 = vmul.f32 %v641, %v792
    %v809 = vmul.f32 %v591, %v802
    %v810 = vmul.f32 %v644, %v802
    %811 = vmatpush.xpose.msra.mxu0 0.0
    %812 = vmatpush.xpose.msra.mxu0 0.0
    %813 = vmatpush.xpose.msra.mxu0 0.0
    %814 = vmatpush.xpose.msra.mxu0 0.0
    %815 = vmatpush.xpose.msra.mxu0 0.0
    %816 = vmatpush.xpose.msra.mxu0 0.0
    %817 = vmatpush.xpose.msra.mxu0 0.0
    %818 = vmatpush.xpose.msra.mxu0 0.0
    %819 = vmatpush.xpose.msra.mxu0 0.0
    %820 = vmatpush.xpose.msra.mxu0 0.0
    %821 = vmatpush.xpose.msra.mxu0 0.0
    %822 = vmatpush.xpose.msra.mxu0 0.0
    %823 = vmatpush.xpose.msra.mxu0 %v809
    %824 = vmatpush.xpose.msra.mxu0 %v807
    %825 = vmatpush.xpose.msra.mxu0 %v805
    %826 = vmatpush.xpose.msra.mxu0 %v803
    %827 = vmatmul.f32.gmra.mxu0 %v731
    %v828 = vpop.f32.mrf.mxu0
    %v829 = vadd.f32 0.0, %v828
    %830 = vmatmul.f32.gmra.mxu0 %v733
    %v831 = vpop.f32.mrf.mxu0
    %v832 = vadd.f32 0.0, %v831
    %833 = vmatmul.f32.gmra.mxu0 %v735
    %v834 = vpop.f32.mrf.mxu0
    %v835 = vadd.f32 0.0, %v834
    %836 = vmatmul.f32.gmra.mxu0 %v737
    %v837 = vpop.f32.mrf.mxu0
    %v838 = vadd.f32 0.0, %v837
    %839 = vdwg.mxu0
    %840 = vmatpush.xpose.msra.mxu0 0.0
    %841 = vmatpush.xpose.msra.mxu0 0.0
    %842 = vmatpush.xpose.msra.mxu0 0.0
    %843 = vmatpush.xpose.msra.mxu0 0.0
    %844 = vmatpush.xpose.msra.mxu0 0.0
    %845 = vmatpush.xpose.msra.mxu0 0.0
    %846 = vmatpush.xpose.msra.mxu0 0.0
    %847 = vmatpush.xpose.msra.mxu0 0.0
    %848 = vmatpush.xpose.msra.mxu0 0.0
    %849 = vmatpush.xpose.msra.mxu0 0.0
    %850 = vmatpush.xpose.msra.mxu0 0.0
    %851 = vmatpush.xpose.msra.mxu0 0.0
    %852 = vmatpush.xpose.msra.mxu0 %v810
    %853 = vmatpush.xpose.msra.mxu0 %v808
    %854 = vmatpush.xpose.msra.mxu0 %v806
    %855 = vmatpush.xpose.msra.mxu0 %v804
    %856 = vmatmul.f32.gmra.mxu0 %v732
    %v857 = vpop.f32.mrf.mxu0
    %v858 = vadd.f32 %v829, %v857
    %859 = vmatmul.f32.gmra.mxu0 %v734
    %v860 = vpop.f32.mrf.mxu0
    %v861 = vadd.f32 %v832, %v860
    %862 = vmatmul.f32.gmra.mxu0 %v736
    %v863 = vpop.f32.mrf.mxu0
    %v864 = vadd.f32 %v835, %v863
    %865 = vmatmul.f32.gmra.mxu0 %v738
    %v866 = vpop.f32.mrf.mxu0
    %v867 = vadd.f32 %v838, %v866
    %868 = vdwg.mxu0
    %v869 = vmul.f32 %v858, %v32
    %v870 = vmul.f32 %v861, %v33
    %v871 = vmul.f32 %v864, %v34
    %v872 = vmul.f32 %v867, %v35
    %v873 = vadd.f32 %v869, %v36
    %v874 = vadd.f32 %v870, %v37
    %v875 = vadd.f32 %v871, %v38
    %v876 = vadd.f32 %v872, %v39
    %v877 = vsel %vm426, %v873, -inf
    %878 = vmax.xlane.f32.xlu0 %v877
    %v879 = vpop.xlane.xlu0 %878
    %v880 = vsel %vm426, %v874, -inf
    %881 = vmax.xlane.f32.xlu0 %v880
    %v882 = vpop.xlane.xlu0 %881
    %v883 = vsel %vm426, %v875, -inf
    %884 = vmax.xlane.f32.xlu0 %v883
    %v885 = vpop.xlane.xlu0 %884
    %v886 = vsel %vm426, %v876, -inf
    %887 = vmax.xlane.f32.xlu0 %v886
    %v888 = vpop.xlane.xlu0 %887
    %v889 = vsub.f32 %v873, %v879
    %v890 = vsub.f32 %v874, %v882
    %v891 = vsub.f32 %v875, %v885
    %v892 = vsub.f32 %v876, %v888
    %v893 = vmul.f32 %v889, 1.442695
    %v894 = vpow.pop %v893
    %v895 = vmul.f32 %v890, 1.442695
    %v896 = vpow.pop %v895
    %v897 = vmul.f32 %v891, 1.442695
    %v898 = vpow.pop %v897
    %v899 = vmul.f32 %v892, 1.442695
    %v900 = vpow.pop %v899
    %v901 = vsel %vm426, %v894, 0.0
    %902 = vadd.xlane.f32.xlu0 %v901
    %v903 = vpop.xlane.xlu0 %902
    %v904 = vsel %vm426, %v896, 0.0
    %905 = vadd.xlane.f32.xlu0 %v904
    %v906 = vpop.xlane.xlu0 %905
    %v907 = vsel %vm426, %v898, 0.0
    %908 = vadd.xlane.f32.xlu0 %v907
    %v909 = vpop.xlane.xlu0 %908
    %v910 = vsel %vm426, %v900, 0.0
    %911 = vadd.xlane.f32.xlu0 %v910
    %v912 = vpop.xlane.xlu0 %911
    %v913 = vrcp.pop %v903
    %v914 = vmul.f32 %v903, %v913
    %v915 = vsub.f32 1.0, %v914
    %v916 = vmul.f32 %v913, %v915
    %v917 = vadd.f32 %v913, %v916
    %vm918 = vweird.f32 %v903
    %vm919 = vweird.f32 %v913
    %vm920 = vmor %vm918, %vm919
    %v921 = vsel %vm920, %v913, %v917
    %v922 = vand.u32 2147483647, %v903
    %vm923 = vcmp.eq.f32.partialorder %v922, 8.507059e+37
    %v924 = vand.u32 %v903, 2147483648
    %v925 = vor.u32 1.1754944e-38, %v924
    %v926 = vsel %vm923, %v925, %v921
    %v927 = vrcp.pop %v906
    %v928 = vmul.f32 %v906, %v927
    %v929 = vsub.f32 1.0, %v928
    %v930 = vmul.f32 %v927, %v929
    %v931 = vadd.f32 %v927, %v930
    %vm932 = vweird.f32 %v906
    %vm933 = vweird.f32 %v927
    %vm934 = vmor %vm932, %vm933
    %v935 = vsel %vm934, %v927, %v931
    %v936 = vand.u32 2147483647, %v906
    %vm937 = vcmp.eq.f32.partialorder %v936, 8.507059e+37
    %v938 = vand.u32 %v906, 2147483648
    %v939 = vor.u32 1.1754944e-38, %v938
    %v940 = vsel %vm937, %v939, %v935
    %v941 = vrcp.pop %v909
    %v942 = vmul.f32 %v909, %v941
    %v943 = vsub.f32 1.0, %v942
    %v944 = vmul.f32 %v941, %v943
    %v945 = vadd.f32 %v941, %v944
    %vm946 = vweird.f32 %v909
    %vm947 = vweird.f32 %v941
    %vm948 = vmor %vm946, %vm947
    %v949 = vsel %vm948, %v941, %v945
    %v950 = vand.u32 2147483647, %v909
    %vm951 = vcmp.eq.f32.partialorder %v950, 8.507059e+37
    %v952 = vand.u32 %v909, 2147483648
    %v953 = vor.u32 1.1754944e-38, %v952
    %v954 = vsel %vm951, %v953, %v949
    %v955 = vrcp.pop %v912
    %v956 = vmul.f32 %v912, %v955
    %v957 = vsub.f32 1.0, %v956
    %v958 = vmul.f32 %v955, %v957
    %v959 = vadd.f32 %v955, %v958
    %vm960 = vweird.f32 %v912
    %vm961 = vweird.f32 %v955
    %vm962 = vmor %vm960, %vm961
    %v963 = vsel %vm962, %v955, %v959
    %v964 = vand.u32 2147483647, %v912
    %vm965 = vcmp.eq.f32.partialorder %v964, 8.507059e+37
    %v966 = vand.u32 %v912, 2147483648
    %v967 = vor.u32 1.1754944e-38, %v966
    %v968 = vsel %vm965, %v967, %v963
    %v969 = vmul.f32 %v894, %v926
    %v970 = vmul.f32 %v896, %v940
    %v971 = vmul.f32 %v898, %v954
    %v972 = vmul.f32 %v900, %v968
    %s973 = scalar_lea.vmem %s4, 32
    %974 = vst.msk [vmem:[%s973] sm:$0xff] %vm426, %v969
    %975 = vst.msk [vmem:[%s973 + $0x8] sm:$0xff] %vm426, %v970
    %976 = vst.msk [vmem:[%s973 + $0x10] sm:$0xff] %vm426, %v971
    %977 = vst.msk [vmem:[%s973 + $0x18] sm:$0xff] %vm426, %v972
    // Predicated region
    $region18: #{spatio_temporal_mutual_attention.1} parent=1 // pred_check
      _
    $region19: #{spatio_temporal_mutual_attention.1} parent=1 // pred_check_branch
      %979 = sbr.rel (0) target = $region21
    $region20: #{spatio_temporal_mutual_attention.1} parent=1 // pred_region
      _
    $region21: #{spatio_temporal_mutual_attention.1} parent=1 // pred_fallthru
      _
    // Predicated region
    $region22: #{spatio_temporal_mutual_attention.1} parent=1 // pred_check
      _
    $region23: #{spatio_temporal_mutual_attention.1} parent=1 // pred_check_branch
      %981 = sbr.rel (0) target = $region25
    $region24: #{spatio_temporal_mutual_attention.1} parent=1 // pred_region
      %983 = vsyncadd [#allocation3], 0
      %s984 = sshll.u32 [#allocation2], 4
      %s985 = int_to_ptr.vmem [resolvable:$true] %s984
      %s986 = sshll.u32 %s5, 4
      %s987 = int_to_ptr.hbm [resolvable:$true] %s986
      %992 = dma.vmem_to_hbm [thread:$0]  %s985, 2048, %s987, [#allocation3], 256, 256, 16
    $region25: #{spatio_temporal_mutual_attention.1} parent=1 // pred_fallthru
      _
    // Predicated region
    $region26: #{spatio_temporal_mutual_attention.1} parent=1 // pred_check
      _
    $region27: #{spatio_temporal_mutual_attention.1} parent=1 // pred_check_branch
      %994 = sbr.rel (0) target = $region29
    $region28: #{spatio_temporal_mutual_attention.1} parent=1 // pred_region
      _
    $region29: #{spatio_temporal_mutual_attention.1} parent=1 // pred_fallthru
      _
    // Predicated region
    $region30: #{spatio_temporal_mutual_attention.1} parent=1 // pred_check
      _
    $region31: #{spatio_temporal_mutual_attention.1} parent=1 // pred_check_branch
      %996 = sbr.rel (0) target = $region33
    $region32: #{spatio_temporal_mutual_attention.1} parent=1 // pred_region
      %998 = dma.done [#allocation3], 2048
    $region33: #{spatio_temporal_mutual_attention.1} parent=1 // pred_fallthru
      _
    %999 = vsyncpa [#allocation3], 1

</llo_original>
